<compile_context>
chip_gen: v7x
topology: tpu7x:2x2x1
jax: 0.10.0
libtpu: 0.0.40
codegen_flags: <defaults>
</compile_context>

<pallas_src>
import jax
import jax.numpy as jnp
import numpy as np
from jax.experimental import pallas as pl
from jax.experimental.pallas import tpu as pltpu


# ----------------------------- Pallas kernel --------------------------------

def group_fc_kernel(x_ref,
                    w1_ref,            # (S*D, S*16+16) bf16  fused [fc1_gr blockdiag | fc1_x0]
                    w2_ref, b2_ref,    # (S*16+16, 64) bf16, (1, 64) f32  fused layer 2
                    wh_ref, bh_ref,    # (64, 64) bf16, (1, 64) f32       head fc1
                    wo_ref, bo_ref,    # (64, 128) bf16 (replicated), (1, 1) f32  fc2
                    out_ref):          # (rows//128, 128) f32 lane-dense output slab
    rows = x_ref.shape[0]          # batch rows in this block (multiple of 128)
    rgrp = out_ref.shape[0]        # rows // 128

    xb = x_ref[...]                                                    # (rows, S*D) bf16

    # layer 1: fused [block-diag fc1_gr | zero-padded fc1_x0]
    z = jnp.dot(xb, w1_ref[...], preferred_element_type=jnp.float32)   # (rows, S*16+16)
    z = jnp.maximum(z, 0.0).astype(jnp.bfloat16)

    # layer 2: block-diag [1/S-mean + BN1gr + fc2_gr | BN1x0 + fc2_x0] -> [hg | h0]
    z = jnp.dot(z, w2_ref[...], preferred_element_type=jnp.float32) + b2_ref[...]
    z = jnp.maximum(z, 0.0).astype(jnp.bfloat16)                       # (rows, 64)

    # head fc1 (BN2x0 / BN2gr folded into the weights)
    z = jnp.dot(z, wh_ref[...], preferred_element_type=jnp.float32) + bh_ref[...]
    z = jnp.maximum(z, 0.0).astype(jnp.bfloat16)                       # (rows, 64)

    # fc2 with the (64, 1) weight replicated to (64, 128): every column of y holds
    # the same per-row prediction.  Same MXU cost as a width-1 dot, lane-dense result.
    y = jnp.dot(z, wo_ref[...], preferred_element_type=jnp.float32)    # (rows, 128)

    # Lane-dense relayout out[r, c] = y[128*r + c] without reshape/transpose of a
    # lane-width-1 array:
    #   1) keep only the "diagonal" entry of each 128-row slab,
    #   2) pool each slab with a 0/1 selection matmul (exactly one nonzero per output,
    #      so there is no accumulation error).
    n_i = jax.lax.broadcasted_iota(jnp.int32, (rows, 128), 0)
    c_i = jax.lax.broadcasted_iota(jnp.int32, (rows, 128), 1)
    ym = jnp.where((n_i & 127) == c_i, y, 0.0).astype(jnp.bfloat16)    # (rows, 128)

    r_i = jax.lax.broadcasted_iota(jnp.int32, (rgrp, rows), 0)
    n_j = jax.lax.broadcasted_iota(jnp.int32, (rgrp, rows), 1)
    lo = r_i * 128
    sel = jnp.where((n_j >= lo) & (n_j < lo + 128), 1.0, 0.0).astype(jnp.bfloat16)

    out_ref[...] = (jnp.dot(sel, ym, preferred_element_type=jnp.float32)
                    + bo_ref[...])                                     # (rgrp, 128)


# ---------------------- parameter init (PyTorch layout) ----------------------

def _linear_weight(key, out_f, in_f):
    """Deterministic PyTorch-style init, layout (out_features, in_features)."""
    bound = 1.0 / np.sqrt(in_f)
    return jax.random.uniform(key, (out_f, in_f), jnp.float32, -bound, bound)


def _bn_fold(key, channels, eps=1e-5):
    """BatchNorm1d(eval) running stats -> per-channel scale/shift (non-trivial
    values so the weight-folding algebra is actually exercised by the test)."""
    k1, k2, k3, k4 = jax.random.split(key, 4)
    gamma = jax.random.uniform(k1, (1, channels), jnp.float32, 0.5, 1.5)
    beta = 0.1 * jax.random.normal(k2, (1, channels), jnp.float32)
    mean = 0.1 * jax.random.normal(k3, (1, channels), jnp.float32)
    var = jax.random.uniform(k4, (1, channels), jnp.float32, 0.5, 1.5)
    scale = gamma / jnp.sqrt(var + eps)
    shift = beta - mean * scale
    return scale, shift


def init_params(key, input_dim):
    ks = jax.random.split(key, 12)
    p = {}
    p['w1x0'] = _linear_weight(ks[0], 16, input_dim)
    p['w2x0'] = _linear_weight(ks[1], 32, 16)
    p['w1gr'] = _linear_weight(ks[2], 16, input_dim)
    p['w2gr'] = _linear_weight(ks[3], 32, 16)
    p['wf1'] = _linear_weight(ks[4], 64, 64)          # fc1: 32+32 -> 64
    p['wf2'] = _linear_weight(ks[5], 1, 64)           # fc2: Linear(64, 1) w/ bias
    bound = 1.0 / np.sqrt(64)
    p['bf2'] = jax.random.uniform(ks[6], (1, 1), jnp.float32, -bound, bound)
    p['s1x0'], p['b1x0'] = _bn_fold(ks[7], 16)
    p['s2x0'], p['b2x0'] = _bn_fold(ks[8], 32)
    p['s1gr'], p['b1gr'] = _bn_fold(ks[9], 16)
    p['s2gr'], p['b2gr'] = _bn_fold(ks[10], 32)
    p['sf1'], p['bf1'] = _bn_fold(ks[11], 64)
    return p


# -------- fold BN / mean / branch-concat into 4 fused weights + 3 biases -----

def fold_params(p, S, D):
    """Fold every BN scale/shift, the 1/S group mean and the branch concatenation
    into fused (bf16) weight matrices + (f32) bias rows.  Call once, reuse."""
    W1x0 = p['w1x0'].T          # (D, 16)
    W2x0 = p['w2x0'].T          # (16, 32)
    W1gr = p['w1gr'].T          # (D, 16)
    W2gr = p['w2gr'].T          # (16, 32)
    Wf1 = p['wf1'].T            # (64, 64)   rows = [x0 inputs (32) | gr inputs (32)]
    Wf2 = p['wf2'].T            # (64, 1)

    s1x0, b1x0 = p['s1x0'], p['b1x0']
    s2x0, b2x0 = p['s2x0'], p['b2x0']
    s1gr, b1gr = p['s1gr'], p['b1gr']
    s2gr, b2gr = p['s2gr'], p['b2gr']
    sf1, bf1 = p['sf1'], p['bf1']

    eye16 = jnp.eye(16, dtype=jnp.float32)
    H1 = S * 16 + 16

    # layer 1: x_flat (S*D) -> [gr per-point features (S*16) | x0 features (16)]
    W_g1 = jnp.kron(jnp.eye(S, dtype=jnp.float32), W1gr)        # (S*D, S*16)
    W_a = jnp.zeros((S * D, 16), jnp.float32).at[:D, :].set(W1x0)
    W1f = jnp.concatenate([W_g1, W_a], axis=1)                   # (S*D, H1)

    # layer 2: block-diag; gr block gets the 1/S mean + BN1gr fold, x0 gets BN1x0
    A = jnp.kron(jnp.ones((S, 1), jnp.float32) / S, eye16)       # (S*16, 16)
    W_g2 = (A * s1gr) @ W2gr                                     # (S*16, 32)
    bias_g2 = b1gr @ W2gr                                        # (1, 32)
    W_b = s1x0.T * W2x0                                          # (16, 32)
    bias_b = b1x0 @ W2x0                                         # (1, 32)
    W2f = jnp.zeros((H1, 64), jnp.float32)
    W2f = W2f.at[:S * 16, :32].set(W_g2)
    W2f = W2f.at[S * 16:, 32:].set(W_b)
    b2f = jnp.concatenate([bias_g2, bias_b], axis=1)             # (1, 64): [gr | x0]

    # head fc1: concat([h0, hg]) @ Wf1 with BN2x0/BN2gr folded; kernel layout is [hg|h0]
    Wf1a, Wf1b = Wf1[:32, :], Wf1[32:, :]                        # x0-rows, gr-rows
    W_h0 = s2x0.T * Wf1a                                         # (32, 64)
    W_hg = s2gr.T * Wf1b                                         # (32, 64)
    Whf = jnp.concatenate([W_hg, W_h0], axis=0)                  # (64, 64)
    bhf = b2x0 @ Wf1a + b2gr @ Wf1b                              # (1, 64)

    # fc2 with BNf1 folded; replicate the (64, 1) weight across 128 lanes
    W_o = sf1.T * Wf2                                            # (64, 1)
    Wo_rep = jnp.broadcast_to(W_o, (64, 128))                    # (64, 128)
    bo = bf1 @ Wf2 + p['bf2']                                    # (1, 1)

    bf = jnp.bfloat16
    return (W1f.astype(bf), W2f.astype(bf), b2f,
            Whf.astype(bf), bhf, Wo_rep.astype(bf), bo)


# ---------------------------- pallas_call wrapper ----------------------------

def _round_up(n, m):
    return ((n + m - 1) // m) * m


def _run_kernel(x2d, fp, n_rows, tn):
    """Run the kernel over the first n_rows rows of x2d (bf16, shape (>=n_rows, S*D)).
    Requires: n_rows % tn == 0, tn % 128 == 0, and (tn // 128 >= 8 or tn == n_rows)."""
    SD = x2d.shape[1]
    w1, w2, b2, wh, bh, wo, bo = fp
    params = (w1, w2, b2, wh, bh, wo, bo)
    grid = (n_rows // tn,)

    x_spec = pl.BlockSpec((tn, SD), lambda i: (i, 0))
    # weights/biases: full blocks, constant block index -> VMEM-resident across steps
    param_specs = [pl.BlockSpec(a.shape, lambda i: (0, 0)) for a in params]
    out_spec = pl.BlockSpec((tn // 128, 128), lambda i: (i, 0))   # lane-dense output

    h1 = w1.shape[1]
    flops = 2 * n_rows * (SD * h1 + h1 * 64 + 64 * 64 + 64 * 128 + 128)
    bytes_accessed = (n_rows * SD * x2d.dtype.itemsize + n_rows * 4 +
                      sum(int(np.prod(a.shape)) * a.dtype.itemsize for a in params))

    out = pl.pallas_call(
        group_fc_kernel,
        out_shape=jax.ShapeDtypeStruct((n_rows // 128, 128), jnp.float32),
        grid=grid,
        in_specs=[x_spec] + param_specs,
        out_specs=out_spec,
        compiler_params=pltpu.CompilerParams(
            dimension_semantics=("parallel",),        # shard batch grid across TCs (v7x)
            vmem_limit_bytes=32 * 1024 * 1024),       # v5e default is only 16 MiB
        cost_estimate=pl.CostEstimate(flops=flops, transcendentals=0,
                                      bytes_accessed=bytes_accessed),
    )(x2d, *params)
    return out.reshape(n_rows, 1)


def group_fc_forward_folded(x, fp, *, tn=4096):
    """x: (N, S, D) float -> (N, 1) float32, using pre-folded params `fp`."""
    N, S, D = x.shape
    x_flat = x.reshape(N, S * D).astype(jnp.bfloat16)   # lane-dense, bf16 input stream

    # batch tile: multiple of 1024 (so the (tn//128, 128) out block obeys (8,128));
    # cap so large batches get >= 2 grid steps for v7x's two TensorCores.
    tn = max(1024, (min(int(tn), 8192) // 1024) * 1024)
    if N >= 2 * 1024:
        tn = max(1024, min(tn, ((N // 2) // 1024) * 1024))

    pieces = []
    n_bulk = (N // tn) * tn
    if n_bulk > 0:
        # Bulk: read straight out of the caller's array; the grid simply does not
        # cover the ragged tail, so no padded copy of the full input is made.
        pieces.append(_run_kernel(x_flat, fp, n_bulk, tn))
    if n_bulk < N:
        # Remainder (< tn rows): small slice + pad to a 128-row multiple, one block.
        n_rem = N - n_bulk
        n_rem_pad = _round_up(n_rem, 128)
        rem = x_flat[n_bulk:]
        if n_rem_pad != n_rem:
            rem = jnp.pad(rem, ((0, n_rem_pad - n_rem), (0, 0)))
        pieces.append(_run_kernel(rem, fp, n_rem_pad, n_rem_pad)[:n_rem])

    return pieces[0] if len(pieces) == 1 else jnp.concatenate(pieces, axis=0)


def group_fc_forward(x, p, *, tn=4096):
    """Convenience entry point: folds params then runs the kernel."""
    _, S, D = x.shape
    return group_fc_forward_folded(x, fold_params(p, S, D), tn=tn)


# ------------- pure-JAX reference (same eval-mode semantics, un-folded) ------

def group_fc_reference(x, p):
    def block(h, w, s, b):
        return jnp.maximum(h @ w.T, 0.0) * s + b
    x0 = x[:, 0]
    h0 = block(x0, p['w1x0'], p['s1x0'], p['b1x0'])
    h0 = block(h0, p['w2x0'], p['s2x0'], p['b2x0'])
    n, s_, d = x.shape
    hg = block(x.reshape(-1, d), p['w1gr'], p['s1gr'], p['b1gr'])
    hg = hg.reshape(n, s_, 16).mean(axis=1)
    hg = block(hg, p['w2gr'], p['s2gr'], p['b2gr'])
    h = jnp.concatenate([h0, hg], axis=1)
    h = block(h, p['wf1'], p['sf1'], p['bf1'])
    return h @ p['wf2'].T + p['bf2']


if __name__ == "__main__":
    key = jax.random.PRNGKey(0)
    kx, kp, kx2 = jax.random.split(key, 3)

    S, D = 8, 8                                   # n_points, input_dim
    params = init_params(kp, D)
    fp = fold_params(params, S, D)                # fold once, reuse (hoisted)

    # Case 1: tiny batch -> single padded block (remainder-only path).
    x_small = jax.random.normal(kx, (20, S, D), jnp.float32)
    out_small = jax.block_until_ready(group_fc_forward_folded(x_small, fp))
    ref_small = group_fc_reference(x_small, params)
    assert out_small.shape == (20, 1)
    np.testing.assert_allclose(np.asarray(out_small), np.asarray(ref_small),
                               rtol=8e-2, atol=8e-2)

    # Case 2: larger ragged batch -> 2-step bulk grid + small remainder call.
    x_big = jax.random.normal(kx2, (2500, S, D), jnp.float32)
    out_big = jax.block_until_ready(group_fc_forward_folded(x_big, fp, tn=1024))
    ref_big = group_fc_reference(x_big, params)
    assert out_big.shape == (2500, 1)
    np.testing.assert_allclose(np.asarray(out_big), np.asarray(ref_big),
                               rtol=8e-2, atol=8e-2)

    print("KERNEL_OK")
</pallas_src>

<mosaic_0001>
module attributes {stable_mosaic.version = 11 : i64} {
  func.func @group_fc_kernel(%arg0: i32, %arg1: memref<128x64xbf16, #tpu.memory_space<vmem>>, %arg2: memref<64x144xbf16, #tpu.memory_space<vmem>>, %arg3: memref<144x64xbf16, #tpu.memory_space<vmem>>, %arg4: memref<1x64xf32, #tpu.memory_space<vmem>>, %arg5: memref<64x64xbf16, #tpu.memory_space<vmem>>, %arg6: memref<1x64xf32, #tpu.memory_space<vmem>>, %arg7: memref<64x128xbf16, #tpu.memory_space<vmem>>, %arg8: memref<1x1xf32, #tpu.memory_space<vmem>>, %arg9: memref<1x128xf32, #tpu.memory_space<vmem>>) attributes {dimension_semantics = [#tpu.dimension_semantics<parallel>], iteration_bounds = array<i64: 1>, scalar_prefetch = 0 : i64, scratch_operands = 0 : i64, tpu.core_type = #tpu.core_type<tc>, window_params = [{transform_indices = @transform_0, window_bounds = array<i64: 128, 64>}, {pipeline_mode = #tpu.pipeline_mode<synchronous>, transform_indices = @transform_1, window_bounds = array<i64: 64, 144>}, {pipeline_mode = #tpu.pipeline_mode<synchronous>, transform_indices = @transform_2, window_bounds = array<i64: 144, 64>}, {pipeline_mode = #tpu.pipeline_mode<synchronous>, transform_indices = @transform_3, window_bounds = array<i64: 1, 64>}, {pipeline_mode = #tpu.pipeline_mode<synchronous>, transform_indices = @transform_4, window_bounds = array<i64: 64, 64>}, {pipeline_mode = #tpu.pipeline_mode<synchronous>, transform_indices = @transform_5, window_bounds = array<i64: 1, 64>}, {pipeline_mode = #tpu.pipeline_mode<synchronous>, transform_indices = @transform_6, window_bounds = array<i64: 64, 128>}, {pipeline_mode = #tpu.pipeline_mode<synchronous>, transform_indices = @transform_7, window_bounds = array<i64: 1, 1>}, {transform_indices = @transform_8, window_bounds = array<i64: 1, 128>}]} {
    %c0 = arith.constant 0 : index
    %c0_0 = arith.constant 0 : index
    %0 = vector.load %arg1[%c0, %c0_0] : memref<128x64xbf16, #tpu.memory_space<vmem>>, vector<128x64xbf16>
    %c0_1 = arith.constant 0 : index
    %c0_2 = arith.constant 0 : index
    %1 = vector.load %arg2[%c0_1, %c0_2] : memref<64x144xbf16, #tpu.memory_space<vmem>>, vector<64x144xbf16>
    %cst = arith.constant dense<0.000000e+00> : vector<128x144xf32>
    %2 = tpu.matmul %0, %1, %cst {dimension_numbers = #tpu.dot_dimension_numbers<[1], [0], [0], [1], [0, 0, 1, 1], [], []>} : vector<128x64xbf16>, vector<64x144xbf16>, vector<128x144xf32> -> vector<128x144xf32>
    %cst_3 = arith.constant 0.000000e+00 : f32
    %3 = vector.broadcast %cst_3 : f32 to vector<128x144xf32>
    %4 = arith.maximumf %2, %3 : vector<128x144xf32>
    %5 = arith.truncf %4 : vector<128x144xf32> to vector<128x144xbf16>
    %c0_4 = arith.constant 0 : index
    %c0_5 = arith.constant 0 : index
    %6 = vector.load %arg3[%c0_4, %c0_5] : memref<144x64xbf16, #tpu.memory_space<vmem>>, vector<144x64xbf16>
    %cst_6 = arith.constant dense<0.000000e+00> : vector<128x64xf32>
    %7 = tpu.matmul %5, %6, %cst_6 {dimension_numbers = #tpu.dot_dimension_numbers<[1], [0], [0], [1], [0, 0, 1, 1], [], []>} : vector<128x144xbf16>, vector<144x64xbf16>, vector<128x64xf32> -> vector<128x64xf32>
    %c0_7 = arith.constant 0 : index
    %c0_8 = arith.constant 0 : index
    %8 = vector.load %arg4[%c0_7, %c0_8] : memref<1x64xf32, #tpu.memory_space<vmem>>, vector<1x64xf32>
    %9 = vector.broadcast %8 : vector<1x64xf32> to vector<128x64xf32>
    %10 = arith.addf %7, %9 : vector<128x64xf32>
    %cst_9 = arith.constant 0.000000e+00 : f32
    %11 = vector.broadcast %cst_9 : f32 to vector<128x64xf32>
    %12 = arith.maximumf %10, %11 : vector<128x64xf32>
    %13 = arith.truncf %12 : vector<128x64xf32> to vector<128x64xbf16>
    %c0_10 = arith.constant 0 : index
    %c0_11 = arith.constant 0 : index
    %14 = vector.load %arg5[%c0_10, %c0_11] : memref<64x64xbf16, #tpu.memory_space<vmem>>, vector<64x64xbf16>
    %cst_12 = arith.constant dense<0.000000e+00> : vector<128x64xf32>
    %15 = tpu.matmul %13, %14, %cst_12 {dimension_numbers = #tpu.dot_dimension_numbers<[1], [0], [0], [1], [0, 0, 1, 1], [], []>} : vector<128x64xbf16>, vector<64x64xbf16>, vector<128x64xf32> -> vector<128x64xf32>
    %c0_13 = arith.constant 0 : index
    %c0_14 = arith.constant 0 : index
    %16 = vector.load %arg6[%c0_13, %c0_14] : memref<1x64xf32, #tpu.memory_space<vmem>>, vector<1x64xf32>
    %17 = vector.broadcast %16 : vector<1x64xf32> to vector<128x64xf32>
    %18 = arith.addf %15, %17 : vector<128x64xf32>
    %cst_15 = arith.constant 0.000000e+00 : f32
    %19 = vector.broadcast %cst_15 : f32 to vector<128x64xf32>
    %20 = arith.maximumf %18, %19 : vector<128x64xf32>
    %21 = arith.truncf %20 : vector<128x64xf32> to vector<128x64xbf16>
    %c0_16 = arith.constant 0 : index
    %c0_17 = arith.constant 0 : index
    %22 = vector.load %arg7[%c0_16, %c0_17] : memref<64x128xbf16, #tpu.memory_space<vmem>>, vector<64x128xbf16>
    %cst_18 = arith.constant dense<0.000000e+00> : vector<128x128xf32>
    %23 = tpu.matmul %21, %22, %cst_18 {dimension_numbers = #tpu.dot_dimension_numbers<[1], [0], [0], [1], [0, 0, 1, 1], [], []>} : vector<128x64xbf16>, vector<64x128xbf16>, vector<128x128xf32> -> vector<128x128xf32>
    %24 = tpu.iota {dimensions = array<i32: 0>} : vector<128x128xi32>
    %25 = tpu.iota {dimensions = array<i32: 1>} : vector<128x128xi32>
    %c127_i32 = arith.constant 127 : i32
    %26 = vector.broadcast %c127_i32 : i32 to vector<128x128xi32>
    %27 = arith.andi %24, %26 : vector<128x128xi32>
    %28 = arith.cmpi eq, %27, %25 : vector<128x128xi32>
    %cst_19 = arith.constant 0.000000e+00 : f32
    %29 = vector.broadcast %cst_19 : f32 to vector<128x128xf32>
    %30 = arith.select %28, %23, %29 : vector<128x128xi1>, vector<128x128xf32>
    %31 = arith.truncf %30 : vector<128x128xf32> to vector<128x128xbf16>
    %32 = tpu.iota {dimensions = array<i32: 0>} : vector<1x128xi32>
    %33 = tpu.iota {dimensions = array<i32: 1>} : vector<1x128xi32>
    %c128_i32 = arith.constant 128 : i32
    %34 = vector.broadcast %c128_i32 : i32 to vector<1x128xi32>
    %35 = arith.muli %32, %34 : vector<1x128xi32>
    %36 = arith.cmpi sge, %33, %35 : vector<1x128xi32>
    %c128_i32_20 = arith.constant 128 : i32
    %37 = vector.broadcast %c128_i32_20 : i32 to vector<1x128xi32>
    %38 = arith.addi %35, %37 : vector<1x128xi32>
    %39 = arith.cmpi slt, %33, %38 : vector<1x128xi32>
    %40 = arith.andi %36, %39 : vector<1x128xi1>
    %cst_21 = arith.constant 1.000000e+00 : f32
    %cst_22 = arith.constant 0.000000e+00 : f32
    %41 = vector.broadcast %cst_21 : f32 to vector<1x128xf32>
    %42 = vector.broadcast %cst_22 : f32 to vector<1x128xf32>
    %43 = arith.select %40, %41, %42 : vector<1x128xi1>, vector<1x128xf32>
    %44 = arith.truncf %43 : vector<1x128xf32> to vector<1x128xbf16>
    %cst_23 = arith.constant dense<0.000000e+00> : vector<1x128xf32>
    %45 = tpu.matmul %44, %31, %cst_23 {dimension_numbers = #tpu.dot_dimension_numbers<[1], [0], [0], [1], [0, 0, 1, 1], [], []>} : vector<1x128xbf16>, vector<128x128xbf16>, vector<1x128xf32> -> vector<1x128xf32>
    %c0_24 = arith.constant 0 : index
    %c0_25 = arith.constant 0 : index
    %46 = vector.load %arg8[%c0_24, %c0_25] : memref<1x1xf32, #tpu.memory_space<vmem>>, vector<1x1xf32>
    %47 = vector.broadcast %46 : vector<1x1xf32> to vector<1x128xf32>
    %48 = arith.addf %45, %47 : vector<1x128xf32>
    %c0_26 = arith.constant 0 : index
    %c0_27 = arith.constant 0 : index
    %49 = vector.load %arg9[%c0_26, %c0_27] : memref<1x128xf32, #tpu.memory_space<vmem>>, vector<1x128xf32>
    tpu.vector_store %arg9[%c0_26, %c0_27], %48 {strides = array<i32>} : memref<1x128xf32, #tpu.memory_space<vmem>>, vector<1x128xf32>,
    return
  }
  func.func @transform_0(%arg0: i32) -> (i32, i32) {
    %c0_i32 = arith.constant 0 : i32
    %c0_i32_0 = arith.constant 0 : i32
    return %arg0, %c0_i32 : i32, i32
  }
  func.func @transform_1(%arg0: i32) -> (i32, i32) {
    %c0_i32 = arith.constant 0 : i32
    %c0_i32_0 = arith.constant 0 : i32
    %c0_i32_1 = arith.constant 0 : i32
    return %c0_i32, %c0_i32_0 : i32, i32
  }
  func.func @transform_2(%arg0: i32) -> (i32, i32) {
    %c0_i32 = arith.constant 0 : i32
    %c0_i32_0 = arith.constant 0 : i32
    %c0_i32_1 = arith.constant 0 : i32
    return %c0_i32, %c0_i32_0 : i32, i32
  }
  func.func @transform_3(%arg0: i32) -> (i32, i32) {
    %c0_i32 = arith.constant 0 : i32
    %c0_i32_0 = arith.constant 0 : i32
    %c0_i32_1 = arith.constant 0 : i32
    return %c0_i32, %c0_i32_0 : i32, i32
  }
  func.func @transform_4(%arg0: i32) -> (i32, i32) {
    %c0_i32 = arith.constant 0 : i32
    %c0_i32_0 = arith.constant 0 : i32
    %c0_i32_1 = arith.constant 0 : i32
    return %c0_i32, %c0_i32_0 : i32, i32
  }
  func.func @transform_5(%arg0: i32) -> (i32, i32) {
    %c0_i32 = arith.constant 0 : i32
    %c0_i32_0 = arith.constant 0 : i32
    %c0_i32_1 = arith.constant 0 : i32
    return %c0_i32, %c0_i32_0 : i32, i32
  }
  func.func @transform_6(%arg0: i32) -> (i32, i32) {
    %c0_i32 = arith.constant 0 : i32
    %c0_i32_0 = arith.constant 0 : i32
    %c0_i32_1 = arith.constant 0 : i32
    return %c0_i32, %c0_i32_0 : i32, i32
  }
  func.func @transform_7(%arg0: i32) -> (i32, i32) {
    %c0_i32 = arith.constant 0 : i32
    %c0_i32_0 = arith.constant 0 : i32
    %c0_i32_1 = arith.constant 0 : i32
    return %c0_i32, %c0_i32_0 : i32, i32
  }
  func.func @transform_8(%arg0: i32) -> (i32, i32) {
    %c0_i32 = arith.constant 0 : i32
    %c0_i32_0 = arith.constant 0 : i32
    return %arg0, %c0_i32 : i32, i32
  }
}

</mosaic_0001>

<llo_original>
// kernel: tpu_custom_call.1
$region0: #{tpu_custom_call.1}
  #allocation0 [shape = 'u32[]', space=smem, size = 0x4, offset = 0x4, fixed_abs, tag = 'smem constant byte address 0x4 - core index']
  #allocation1 [shape = 'u32[144,128]{1,0:T(1,128)}', space=vmem, size = 0x12000, scoped, tag = 'internal scratch']
  #allocation2 [shape = 'f32[1,1]{1,0:T(1,128)S(1)}', space=vmem, size = 0x200, scoped, tag = 'scoped memory for tpu_custom_call.1']
  %s0 = inlined_call_operand.vmem [shape: bf16[128,64], index: 0, kind: input, shape index: {}]
  %s1 = inlined_call_operand.vmem [shape: bf16[64,144], index: 1, kind: input, shape index: {}]
  %s2 = inlined_call_operand.vmem [shape: bf16[144,64], index: 2, kind: input, shape index: {}]
  %s3 = inlined_call_operand.vmem [shape: f32[1,64], index: 3, kind: input, shape index: {}]
  %s4 = inlined_call_operand.vmem [shape: bf16[64,64], index: 4, kind: input, shape index: {}]
  %s5 = inlined_call_operand.vmem [shape: f32[1,64], index: 5, kind: input, shape index: {}]
  %s6 = inlined_call_operand.vmem [shape: bf16[64,128], index: 6, kind: input, shape index: {}]
  %s7 = inlined_call_operand.<no memory space> [shape: f32[1,1], index: 7, kind: input, shape index: {}]
  %s8 = inlined_call_operand.hbm [shape: f32[1,128], index: 8, kind: output, shape index: {}]
  %s9 = sld [smem:[#allocation0]]
  $region42: #{tpu_custom_call.1} parent=0
    _
  %s11 = ssub.s32 1, %s9
  %s12 = scalar_select 0, %s11, %s9
  %v13 = vstv %s7
  %14 = vst [vmem:[#allocation2] sm:$0x1] %v13
  $region1: #{tpu_custom_call.1} parent=0
    #allocation3 [shape = 'u8[512]{0}', space=vmem, size = 0x400, scoped, tag = 'output window, operand 0, single buffered']
    #allocation4 [shape = 's32[1]{0}', space=sflag, size = 0x4, scoped, tag = 'scoped memory for tpu_custom_call.1']
    %15 = vsyncpa [#allocation4], 0
    // Predicated region
    $region2: #{tpu_custom_call.1} parent=1 // pred_check
      _
    $region3: #{tpu_custom_call.1} parent=1 // pred_check_branch
      %17 = sbr.rel (0) target = $region5
    $region4: #{tpu_custom_call.1} parent=1 // pred_region
      _
    $region5: #{tpu_custom_call.1} parent=1 // pred_fallthru
      _
    // Predicated region
    $region6: #{tpu_custom_call.1} parent=1 // pred_check
      _
    $region7: #{tpu_custom_call.1} parent=1 // pred_check_branch
      %19 = sbr.rel (0) target = $region9
    $region8: #{tpu_custom_call.1} parent=1 // pred_region
      _
    $region9: #{tpu_custom_call.1} parent=1 // pred_fallthru
      _
    // Predicated region
    $region10: #{tpu_custom_call.1} parent=1 // pred_check
      _
    $region11: #{tpu_custom_call.1} parent=1 // pred_check_branch
      %21 = sbr.rel (0) target = $region13
    $region12: #{tpu_custom_call.1} parent=1 // pred_region
      _
    $region13: #{tpu_custom_call.1} parent=1 // pred_fallthru
      _
    // Predicated region
    $region14: #{tpu_custom_call.1} parent=1 // pred_check
      _
    $region15: #{tpu_custom_call.1} parent=1 // pred_check_branch
      %23 = sbr.rel (0) target = $region17
    $region16: #{tpu_custom_call.1} parent=1 // pred_region
      _
    $region17: #{tpu_custom_call.1} parent=1 // pred_fallthru
      _
    // Predicated region
    $region18: #{tpu_custom_call.1} parent=1 // pred_check
      _
    $region19: #{tpu_custom_call.1} parent=1 // pred_check_branch
      %25 = sbr.rel (0) target = $region21
    $region20: #{tpu_custom_call.1} parent=1 // pred_region
      _
    $region21: #{tpu_custom_call.1} parent=1 // pred_fallthru
      _
    // Predicated region
    $region22: #{tpu_custom_call.1} parent=1 // pred_check
      _
    $region23: #{tpu_custom_call.1} parent=1 // pred_check_branch
      %27 = sbr.rel (0) target = $region25
    $region24: #{tpu_custom_call.1} parent=1 // pred_region
      _
    $region25: #{tpu_custom_call.1} parent=1 // pred_fallthru
      _
    // Predicated region
    $region26: #{tpu_custom_call.1} parent=1 // pred_check
      _
    $region27: #{tpu_custom_call.1} parent=1 // pred_check_branch
      %29 = sbr.rel (0) target = $region29
    $region28: #{tpu_custom_call.1} parent=1 // pred_region
      _
    $region29: #{tpu_custom_call.1} parent=1 // pred_fallthru
      _
    // Predicated region
    $region30: #{tpu_custom_call.1} parent=1 // pred_check
      _
    $region31: #{tpu_custom_call.1} parent=1 // pred_check_branch
      %31 = sbr.rel (0) target = $region33
    $region32: #{tpu_custom_call.1} parent=1 // pred_region
      _
    $region33: #{tpu_custom_call.1} parent=1 // pred_fallthru
      _
    %v33 = vld [vmem:[%s0] sm:$0xf]
    %v34 = vld [vmem:[%s0 + $0x4] sm:$0xf]
    %v35 = vld [vmem:[%s0 + $0x8] sm:$0xf]
    %v36 = vld [vmem:[%s0 + $0xc] sm:$0xf]
    %v37 = vld [vmem:[%s0 + $0x10] sm:$0xf]
    %v38 = vld [vmem:[%s0 + $0x14] sm:$0xf]
    %v39 = vld [vmem:[%s0 + $0x18] sm:$0xf]
    %v40 = vld [vmem:[%s0 + $0x1c] sm:$0xf]
    %v41 = vld [vmem:[%s0 + $0x20] sm:$0xf]
    %v42 = vld [vmem:[%s0 + $0x24] sm:$0xf]
    %v43 = vld [vmem:[%s0 + $0x28] sm:$0xf]
    %v44 = vld [vmem:[%s0 + $0x2c] sm:$0xf]
    %v45 = vld [vmem:[%s0 + $0x30] sm:$0xf]
    %v46 = vld [vmem:[%s0 + $0x34] sm:$0xf]
    %v47 = vld [vmem:[%s0 + $0x38] sm:$0xf]
    %v48 = vld [vmem:[%s0 + $0x3c] sm:$0xf]
    %v49 = vld [vmem:[%s1] sm:$0xff]
    %v50 = vld [vmem:[%s1 + $0x8] sm:$0xff]
    %v51 = vld [vmem:[%s1 + $0x10] sm:$0xff]
    %v52 = vld [vmem:[%s1 + $0x18] sm:$0xff]
    %v53 = vld [vmem:[%s1 + $0x20] sm:$0xff]
    %v54 = vld [vmem:[%s1 + $0x28] sm:$0xff]
    %v55 = vld [vmem:[%s1 + $0x30] sm:$0xff]
    %v56 = vld [vmem:[%s1 + $0x38] sm:$0xff]
    %v73 = vunpack.c.l.b16 %v33
    %v74 = vunpack.c.l.b16 %v34
    %v75 = vunpack.c.l.b16 %v35
    %v76 = vunpack.c.l.b16 %v36
    %v77 = vunpack.c.l.b16 %v37
    %v78 = vunpack.c.l.b16 %v38
    %v79 = vunpack.c.l.b16 %v39
    %v80 = vunpack.c.l.b16 %v40
    %v81 = vunpack.c.l.b16 %v41
    %v82 = vunpack.c.l.b16 %v42
    %v83 = vunpack.c.l.b16 %v43
    %v84 = vunpack.c.l.b16 %v44
    %v85 = vunpack.c.l.b16 %v45
    %v86 = vunpack.c.l.b16 %v46
    %v87 = vunpack.c.l.b16 %v47
    %v88 = vunpack.c.l.b16 %v48
    %v89 = vpack.c.b16 %v74, %v73
    %v90 = vpack.c.b16 %v76, %v75
    %v91 = vpack.c.b16 %v78, %v77
    %v92 = vpack.c.b16 %v80, %v79
    %v93 = vpack.c.b16 %v82, %v81
    %v94 = vpack.c.b16 %v84, %v83
    %v95 = vpack.c.b16 %v86, %v85
    %v96 = vpack.c.b16 %v88, %v87
    %v105 = vunpack.c.l.b16 %v49
    %v106 = vunpack.c.h.b16 %v49
    %v107 = vunpack.c.l.b16 %v50
    %v108 = vunpack.c.h.b16 %v50
    %v109 = vunpack.c.l.b16 %v51
    %v110 = vunpack.c.h.b16 %v51
    %v111 = vunpack.c.l.b16 %v52
    %v112 = vunpack.c.h.b16 %v52
    %v113 = vunpack.c.l.b16 %v53
    %v114 = vunpack.c.h.b16 %v53
    %v115 = vunpack.c.l.b16 %v54
    %v116 = vunpack.c.h.b16 %v54
    %v117 = vunpack.c.l.b16 %v55
    %v118 = vunpack.c.h.b16 %v55
    %v119 = vunpack.c.l.b16 %v56
    %v120 = vunpack.c.h.b16 %v56
    %v121 = vpack.c.b16 %v107, %v105
    %v122 = vpack.c.b16 %v108, %v106
    %v123 = vpack.c.b16 %v111, %v109
    %v124 = vpack.c.b16 %v112, %v110
    %v125 = vpack.c.b16 %v115, %v113
    %v126 = vpack.c.b16 %v116, %v114
    %v127 = vpack.c.b16 %v119, %v117
    %v128 = vpack.c.b16 %v120, %v118
    %vm137 = vcmask 523264
    %v139 = vsel %vm137, %v89, 0
    %v142 = vsel %vm137, %v90, 0
    %v145 = vsel %vm137, %v91, 0
    %v148 = vsel %vm137, %v92, 0
    %v151 = vsel %vm137, %v93, 0
    %v154 = vsel %vm137, %v94, 0
    %v157 = vsel %vm137, %v95, 0
    %v160 = vsel %vm137, %v96, 0
    %162 = vmatprep.subr.bf16.mxu0 %v122
    %163 = vmatpush1.bf16.msra.mxu0 %v121
    %164 = vmatprep.subr.bf16.mxu0 %v124
    %165 = vmatpush1.bf16.msra.mxu0 %v123
    %166 = vmatprep.subr.bf16.mxu0 %v126
    %167 = vmatpush1.bf16.msra.mxu0 %v125
    %168 = vmatprep.subr.bf16.mxu0 %v128
    %169 = vmatpush1.bf16.msra.mxu0 %v127
    %170 = vmatprep.subr.bf16.mxu0 0
    %171 = vmatpush1.bf16.msra.mxu0 0
    %172 = vmatprep.subr.bf16.mxu0 0
    %173 = vmatpush1.bf16.msra.mxu0 0
    %174 = vmatprep.subr.bf16.mxu0 0
    %175 = vmatpush1.bf16.msra.mxu0 0
    %176 = vmatprep.subr.bf16.mxu0 0
    %177 = vmatpush1.bf16.msra.mxu0 0
    %178 = vmatprep.subr.bf16.mxu0 0
    %179 = vmatpush1.bf16.msra.mxu0 0
    %180 = vmatprep.subr.bf16.mxu0 0
    %181 = vmatpush1.bf16.msra.mxu0 0
    %182 = vmatprep.subr.bf16.mxu0 0
    %183 = vmatpush1.bf16.msra.mxu0 0
    %184 = vmatprep.subr.bf16.mxu0 0
    %185 = vmatpush1.bf16.msra.mxu0 0
    %186 = vmatprep.subr.bf16.mxu0 0
    %187 = vmatpush1.bf16.msra.mxu0 0
    %188 = vmatprep.subr.bf16.mxu0 0
    %189 = vmatpush1.bf16.msra.mxu0 0
    %190 = vmatprep.subr.bf16.mxu0 0
    %191 = vmatpush1.bf16.msra.mxu0 0
    %192 = vmatprep.subr.bf16.mxu0 0
    %193 = vmatpush1.bf16.msra.mxu0 0
    %194 = vmatprep.mubr.bf16.mxu0 0
    %195 = vmatmul.mubr.bf16.gmra.mrb[0].mxu0 %v139
    %v196 = vpop.f32.mrb[0].mxu0
    %v197 = vadd.f32 0.0, %v196
    %v198 = vpop.f32.mrb[0].mxu0
    %v199 = vadd.f32 0.0, %v198
    %v200 = vpop.f32.mrb[0].mxu0
    %v201 = vadd.f32 0.0, %v200
    %v202 = vpop.f32.mrb[0].mxu0
    %v203 = vadd.f32 0.0, %v202
    %204 = vmatprep.mubr.bf16.mxu0 0
    %205 = vmatmul.mubr.bf16.gmra.mrb[0].mxu0 %v142
    %v206 = vpop.f32.mrb[0].mxu0
    %v207 = vadd.f32 0.0, %v206
    %v208 = vpop.f32.mrb[0].mxu0
    %v209 = vadd.f32 0.0, %v208
    %v210 = vpop.f32.mrb[0].mxu0
    %v211 = vadd.f32 0.0, %v210
    %v212 = vpop.f32.mrb[0].mxu0
    %v213 = vadd.f32 0.0, %v212
    %214 = vmatprep.mubr.bf16.mxu0 0
    %215 = vmatmul.mubr.bf16.gmra.mrb[0].mxu0 %v145
    %v216 = vpop.f32.mrb[0].mxu0
    %v217 = vadd.f32 0.0, %v216
    %v218 = vpop.f32.mrb[0].mxu0
    %v219 = vadd.f32 0.0, %v218
    %v220 = vpop.f32.mrb[0].mxu0
    %v221 = vadd.f32 0.0, %v220
    %v222 = vpop.f32.mrb[0].mxu0
    %v223 = vadd.f32 0.0, %v222
    %224 = vmatprep.mubr.bf16.mxu0 0
    %225 = vmatmul.mubr.bf16.gmra.mrb[0].mxu0 %v148
    %v226 = vpop.f32.mrb[0].mxu0
    %v227 = vadd.f32 0.0, %v226
    %v228 = vpop.f32.mrb[0].mxu0
    %v229 = vadd.f32 0.0, %v228
    %v230 = vpop.f32.mrb[0].mxu0
    %v231 = vadd.f32 0.0, %v230
    %v232 = vpop.f32.mrb[0].mxu0
    %v233 = vadd.f32 0.0, %v232
    %234 = vmatprep.mubr.bf16.mxu0 0
    %235 = vmatmul.mubr.bf16.gmra.mrb[0].mxu0 %v151
    %v236 = vpop.f32.mrb[0].mxu0
    %v237 = vadd.f32 0.0, %v236
    %v238 = vpop.f32.mrb[0].mxu0
    %v239 = vadd.f32 0.0, %v238
    %v240 = vpop.f32.mrb[0].mxu0
    %v241 = vadd.f32 0.0, %v240
    %v242 = vpop.f32.mrb[0].mxu0
    %v243 = vadd.f32 0.0, %v242
    %244 = vmatprep.mubr.bf16.mxu0 0
    %245 = vmatmul.mubr.bf16.gmra.mrb[0].mxu0 %v154
    %v246 = vpop.f32.mrb[0].mxu0
    %v247 = vadd.f32 0.0, %v246
    %v248 = vpop.f32.mrb[0].mxu0
    %v249 = vadd.f32 0.0, %v248
    %v250 = vpop.f32.mrb[0].mxu0
    %v251 = vadd.f32 0.0, %v250
    %v252 = vpop.f32.mrb[0].mxu0
    %v253 = vadd.f32 0.0, %v252
    %254 = vmatprep.mubr.bf16.mxu0 0
    %255 = vmatmul.mubr.bf16.gmra.mrb[0].mxu0 %v157
    %v256 = vpop.f32.mrb[0].mxu0
    %v257 = vadd.f32 0.0, %v256
    %v258 = vpop.f32.mrb[0].mxu0
    %v259 = vadd.f32 0.0, %v258
    %v260 = vpop.f32.mrb[0].mxu0
    %v261 = vadd.f32 0.0, %v260
    %v262 = vpop.f32.mrb[0].mxu0
    %v263 = vadd.f32 0.0, %v262
    %264 = vmatprep.mubr.bf16.mxu0 0
    %265 = vmatmul.mubr.bf16.gmra.mrb[0].mxu0 %v160
    %v266 = vpop.f32.mrb[0].mxu0
    %v267 = vadd.f32 0.0, %v266
    %v268 = vpop.f32.mrb[0].mxu0
    %v269 = vadd.f32 0.0, %v268
    %v270 = vpop.f32.mrb[0].mxu0
    %v271 = vadd.f32 0.0, %v270
    %v272 = vpop.f32.mrb[0].mxu0
    %v273 = vadd.f32 0.0, %v272
    %274 = vdwg.mxu0
    %v275 = vmax.f32 %v197, 0.0
    %v276 = vmax.f32 %v199, 0.0
    %v277 = vmax.f32 %v201, 0.0
    %v278 = vmax.f32 %v203, 0.0
    %v279 = vmax.f32 %v207, 0.0
    %v280 = vmax.f32 %v209, 0.0
    %v281 = vmax.f32 %v211, 0.0
    %v282 = vmax.f32 %v213, 0.0
    %v283 = vmax.f32 %v217, 0.0
    %v284 = vmax.f32 %v219, 0.0
    %v285 = vmax.f32 %v221, 0.0
    %v286 = vmax.f32 %v223, 0.0
    %v287 = vmax.f32 %v227, 0.0
    %v288 = vmax.f32 %v229, 0.0
    %v289 = vmax.f32 %v231, 0.0
    %v290 = vmax.f32 %v233, 0.0
    %v291 = vmax.f32 %v237, 0.0
    %v292 = vmax.f32 %v239, 0.0
    %v293 = vmax.f32 %v241, 0.0
    %v294 = vmax.f32 %v243, 0.0
    %v295 = vmax.f32 %v247, 0.0
    %v296 = vmax.f32 %v249, 0.0
    %v297 = vmax.f32 %v251, 0.0
    %v298 = vmax.f32 %v253, 0.0
    %v299 = vmax.f32 %v257, 0.0
    %v300 = vmax.f32 %v259, 0.0
    %v301 = vmax.f32 %v261, 0.0
    %v302 = vmax.f32 %v263, 0.0
    %v303 = vmax.f32 %v267, 0.0
    %v304 = vmax.f32 %v269, 0.0
    %v305 = vmax.f32 %v271, 0.0
    %v306 = vmax.f32 %v273, 0.0
    %v307 = vpack.c.bf16 %v277, %v275
    %v308 = vpack.c.bf16 %v278, %v276
    %v309 = vpack.c.bf16 %v281, %v279
    %v310 = vpack.c.bf16 %v282, %v280
    %v311 = vpack.c.bf16 %v285, %v283
    %v312 = vpack.c.bf16 %v286, %v284
    %v313 = vpack.c.bf16 %v289, %v287
    %v314 = vpack.c.bf16 %v290, %v288
    %v315 = vpack.c.bf16 %v293, %v291
    %v316 = vpack.c.bf16 %v294, %v292
    %v317 = vpack.c.bf16 %v297, %v295
    %v318 = vpack.c.bf16 %v298, %v296
    %v319 = vpack.c.bf16 %v301, %v299
    %v320 = vpack.c.bf16 %v302, %v300
    %v321 = vpack.c.bf16 %v305, %v303
    %v322 = vpack.c.bf16 %v306, %v304
    %v323 = vld [vmem:[%s2] sm:$0xf]
    %v324 = vld [vmem:[%s2 + $0x4] sm:$0xf]
    %v325 = vld [vmem:[%s2 + $0x8] sm:$0xf]
    %v326 = vld [vmem:[%s2 + $0xc] sm:$0xf]
    %v327 = vld [vmem:[%s2 + $0x10] sm:$0xf]
    %v328 = vld [vmem:[%s2 + $0x14] sm:$0xf]
    %v329 = vld [vmem:[%s2 + $0x18] sm:$0xf]
    %v330 = vld [vmem:[%s2 + $0x1c] sm:$0xf]
    %v331 = vld [vmem:[%s2 + $0x20] sm:$0xf]
    %v332 = vld [vmem:[%s2 + $0x24] sm:$0xf]
    %v333 = vld [vmem:[%s2 + $0x28] sm:$0xf]
    %v334 = vld [vmem:[%s2 + $0x2c] sm:$0xf]
    %v335 = vld [vmem:[%s2 + $0x30] sm:$0xf]
    %v336 = vld [vmem:[%s2 + $0x34] sm:$0xf]
    %v337 = vld [vmem:[%s2 + $0x38] sm:$0xf]
    %v338 = vld [vmem:[%s2 + $0x3c] sm:$0xf]
    %v339 = vld [vmem:[%s2 + $0x40] sm:$0xf]
    %v340 = vld [vmem:[%s2 + $0x44] sm:$0xf]
    %v341 = vld [vmem:[%s3] sm:$0x1]
    %v343 = vlaneseq
    %v344 = vshrl.u32 %v343, 7
    %v345 = vsub.s32 0, %v344
    %v346 = vrot.slane %v341, %v345
    %v366 = vunpack.c.l.b16 %v323
    %v367 = vunpack.c.l.b16 %v324
    %v368 = vunpack.c.l.b16 %v325
    %v369 = vunpack.c.l.b16 %v326
    %v370 = vunpack.c.l.b16 %v327
    %v371 = vunpack.c.l.b16 %v328
    %v372 = vunpack.c.l.b16 %v329
    %v373 = vunpack.c.l.b16 %v330
    %v374 = vunpack.c.l.b16 %v331
    %v375 = vunpack.c.l.b16 %v332
    %v376 = vunpack.c.l.b16 %v333
    %v377 = vunpack.c.l.b16 %v334
    %v378 = vunpack.c.l.b16 %v335
    %v379 = vunpack.c.l.b16 %v336
    %v380 = vunpack.c.l.b16 %v337
    %v381 = vunpack.c.l.b16 %v338
    %v382 = vunpack.c.l.b16 %v339
    %v383 = vunpack.c.l.b16 %v340
    %v384 = vpack.c.b16 %v367, %v366
    %v385 = vpack.c.b16 %v369, %v368
    %v386 = vpack.c.b16 %v371, %v370
    %v387 = vpack.c.b16 %v373, %v372
    %v388 = vpack.c.b16 %v375, %v374
    %v389 = vpack.c.b16 %v377, %v376
    %v390 = vpack.c.b16 %v379, %v378
    %v391 = vpack.c.b16 %v381, %v380
    %v392 = vpack.c.b16 %v383, %v382
    %vm402 = vcmask 130048
    %v404 = vsel %vm402, %v308, 0
    %v407 = vsel %vm402, %v310, 0
    %v410 = vsel %vm402, %v312, 0
    %v413 = vsel %vm402, %v314, 0
    %v416 = vsel %vm402, %v316, 0
    %v419 = vsel %vm402, %v318, 0
    %v422 = vsel %vm402, %v320, 0
    %v425 = vsel %vm402, %v322, 0
    %427 = vmatprep.subr.bf16.mxu0 0
    %428 = vmatpush1.bf16.msra.mxu0 %v384
    %429 = vmatprep.subr.bf16.mxu0 0
    %430 = vmatpush1.bf16.msra.mxu0 %v385
    %431 = vmatprep.subr.bf16.mxu0 0
    %432 = vmatpush1.bf16.msra.mxu0 %v386
    %433 = vmatprep.subr.bf16.mxu0 0
    %434 = vmatpush1.bf16.msra.mxu0 %v387
    %435 = vmatprep.subr.bf16.mxu0 0
    %436 = vmatpush1.bf16.msra.mxu0 %v388
    %437 = vmatprep.subr.bf16.mxu0 0
    %438 = vmatpush1.bf16.msra.mxu0 %v389
    %439 = vmatprep.subr.bf16.mxu0 0
    %440 = vmatpush1.bf16.msra.mxu0 %v390
    %441 = vmatprep.subr.bf16.mxu0 0
    %442 = vmatpush1.bf16.msra.mxu0 %v391
    %443 = vmatprep.subr.bf16.mxu0 0
    %444 = vmatpush1.bf16.msra.mxu0 %v392
    %445 = vmatprep.subr.bf16.mxu0 0
    %446 = vmatpush1.bf16.msra.mxu0 0
    %447 = vmatprep.subr.bf16.mxu0 0
    %448 = vmatpush1.bf16.msra.mxu0 0
    %449 = vmatprep.subr.bf16.mxu0 0
    %450 = vmatpush1.bf16.msra.mxu0 0
    %451 = vmatprep.subr.bf16.mxu0 0
    %452 = vmatpush1.bf16.msra.mxu0 0
    %453 = vmatprep.subr.bf16.mxu0 0
    %454 = vmatpush1.bf16.msra.mxu0 0
    %455 = vmatprep.subr.bf16.mxu0 0
    %456 = vmatpush1.bf16.msra.mxu0 0
    %457 = vmatprep.subr.bf16.mxu0 0
    %458 = vmatpush1.bf16.msra.mxu0 0
    %459 = vmatprep.mubr.bf16.mxu0 %v404
    %460 = vmatmul.mubr.bf16.gmra.mrb[0].mxu0 %v307
    %v461 = vpop.f32.mrb[0].mxu0
    %v462 = vadd.f32 %v346, %v461
    %v463 = vpop.f32.mrb[0].mxu0
    %v464 = vpop.f32.mrb[0].mxu0
    %v465 = vadd.f32 %v346, %v464
    %v466 = vpop.f32.mrb[0].mxu0
    %467 = vmatprep.mubr.bf16.mxu0 %v407
    %468 = vmatmul.mubr.bf16.gmra.mrb[0].mxu0 %v309
    %v469 = vpop.f32.mrb[0].mxu0
    %v470 = vadd.f32 %v346, %v469
    %v471 = vpop.f32.mrb[0].mxu0
    %v472 = vpop.f32.mrb[0].mxu0
    %v473 = vadd.f32 %v346, %v472
    %v474 = vpop.f32.mrb[0].mxu0
    %475 = vmatprep.mubr.bf16.mxu0 %v410
    %476 = vmatmul.mubr.bf16.gmra.mrb[0].mxu0 %v311
    %v477 = vpop.f32.mrb[0].mxu0
    %v478 = vadd.f32 %v346, %v477
    %v479 = vpop.f32.mrb[0].mxu0
    %v480 = vpop.f32.mrb[0].mxu0
    %v481 = vadd.f32 %v346, %v480
    %v482 = vpop.f32.mrb[0].mxu0
    %483 = vmatprep.mubr.bf16.mxu0 %v413
    %484 = vmatmul.mubr.bf16.gmra.mrb[0].mxu0 %v313
    %v485 = vpop.f32.mrb[0].mxu0
    %v486 = vadd.f32 %v346, %v485
    %v487 = vpop.f32.mrb[0].mxu0
    %v488 = vpop.f32.mrb[0].mxu0
    %v489 = vadd.f32 %v346, %v488
    %v490 = vpop.f32.mrb[0].mxu0
    %491 = vmatprep.mubr.bf16.mxu0 %v416
    %492 = vmatmul.mubr.bf16.gmra.mrb[0].mxu0 %v315
    %v493 = vpop.f32.mrb[0].mxu0
    %v494 = vadd.f32 %v346, %v493
    %v495 = vpop.f32.mrb[0].mxu0
    %v496 = vpop.f32.mrb[0].mxu0
    %v497 = vadd.f32 %v346, %v496
    %v498 = vpop.f32.mrb[0].mxu0
    %499 = vmatprep.mubr.bf16.mxu0 %v419
    %500 = vmatmul.mubr.bf16.gmra.mrb[0].mxu0 %v317
    %v501 = vpop.f32.mrb[0].mxu0
    %v502 = vadd.f32 %v346, %v501
    %v503 = vpop.f32.mrb[0].mxu0
    %v504 = vpop.f32.mrb[0].mxu0
    %v505 = vadd.f32 %v346, %v504
    %v506 = vpop.f32.mrb[0].mxu0
    %507 = vmatprep.mubr.bf16.mxu0 %v422
    %508 = vmatmul.mubr.bf16.gmra.mrb[0].mxu0 %v319
    %v509 = vpop.f32.mrb[0].mxu0
    %v510 = vadd.f32 %v346, %v509
    %v511 = vpop.f32.mrb[0].mxu0
    %v512 = vpop.f32.mrb[0].mxu0
    %v513 = vadd.f32 %v346, %v512
    %v514 = vpop.f32.mrb[0].mxu0
    %515 = vmatprep.mubr.bf16.mxu0 %v425
    %516 = vmatmul.mubr.bf16.gmra.mrb[0].mxu0 %v321
    %v517 = vpop.f32.mrb[0].mxu0
    %v518 = vadd.f32 %v346, %v517
    %v519 = vpop.f32.mrb[0].mxu0
    %v520 = vpop.f32.mrb[0].mxu0
    %v521 = vadd.f32 %v346, %v520
    %v522 = vpop.f32.mrb[0].mxu0
    %523 = vdwg.mxu0
    %v524 = vmax.f32 %v462, 0.0
    %v525 = vmax.f32 %v465, 0.0
    %v526 = vmax.f32 %v470, 0.0
    %v527 = vmax.f32 %v473, 0.0
    %v528 = vmax.f32 %v478, 0.0
    %v529 = vmax.f32 %v481, 0.0
    %v530 = vmax.f32 %v486, 0.0
    %v531 = vmax.f32 %v489, 0.0
    %v532 = vmax.f32 %v494, 0.0
    %v533 = vmax.f32 %v497, 0.0
    %v534 = vmax.f32 %v502, 0.0
    %v535 = vmax.f32 %v505, 0.0
    %v536 = vmax.f32 %v510, 0.0
    %v537 = vmax.f32 %v513, 0.0
    %v538 = vmax.f32 %v518, 0.0
    %v539 = vmax.f32 %v521, 0.0
    %v540 = vpack.c.bf16 %v525, %v524
    %v541 = vpack.c.bf16 %v527, %v526
    %v542 = vpack.c.bf16 %v529, %v528
    %v543 = vpack.c.bf16 %v531, %v530
    %v544 = vpack.c.bf16 %v533, %v532
    %v545 = vpack.c.bf16 %v535, %v534
    %v546 = vpack.c.bf16 %v537, %v536
    %v547 = vpack.c.bf16 %v539, %v538
    %v548 = vld [vmem:[%s4] sm:$0xf]
    %v549 = vld [vmem:[%s4 + $0x4] sm:$0xf]
    %v550 = vld [vmem:[%s4 + $0x8] sm:$0xf]
    %v551 = vld [vmem:[%s4 + $0xc] sm:$0xf]
    %v552 = vld [vmem:[%s4 + $0x10] sm:$0xf]
    %v553 = vld [vmem:[%s4 + $0x14] sm:$0xf]
    %v554 = vld [vmem:[%s4 + $0x18] sm:$0xf]
    %v555 = vld [vmem:[%s4 + $0x1c] sm:$0xf]
    %v556 = vld [vmem:[%s5] sm:$0x1]
    %v558 = vlaneseq
    %v559 = vshrl.u32 %v558, 7
    %v560 = vsub.s32 0, %v559
    %v561 = vrot.slane %v556, %v560
    %v571 = vunpack.c.l.b16 %v548
    %v572 = vunpack.c.l.b16 %v549
    %v573 = vunpack.c.l.b16 %v550
    %v574 = vunpack.c.l.b16 %v551
    %v575 = vunpack.c.l.b16 %v552
    %v576 = vunpack.c.l.b16 %v553
    %v577 = vunpack.c.l.b16 %v554
    %v578 = vunpack.c.l.b16 %v555
    %v579 = vpack.c.b16 %v572, %v571
    %v580 = vpack.c.b16 %v574, %v573
    %v581 = vpack.c.b16 %v576, %v575
    %v582 = vpack.c.b16 %v578, %v577
    %v588 = vsel %vm137, %v540, 0
    %v591 = vsel %vm137, %v541, 0
    %v594 = vsel %vm137, %v542, 0
    %v597 = vsel %vm137, %v543, 0
    %v600 = vsel %vm137, %v544, 0
    %v603 = vsel %vm137, %v545, 0
    %v606 = vsel %vm137, %v546, 0
    %v609 = vsel %vm137, %v547, 0
    %611 = vmatprep.subr.bf16.mxu0 0
    %612 = vmatpush1.bf16.msra.mxu0 %v579
    %613 = vmatprep.subr.bf16.mxu0 0
    %614 = vmatpush1.bf16.msra.mxu0 %v580
    %615 = vmatprep.subr.bf16.mxu0 0
    %616 = vmatpush1.bf16.msra.mxu0 %v581
    %617 = vmatprep.subr.bf16.mxu0 0
    %618 = vmatpush1.bf16.msra.mxu0 %v582
    %619 = vmatprep.subr.bf16.mxu0 0
    %620 = vmatpush1.bf16.msra.mxu0 0
    %621 = vmatprep.subr.bf16.mxu0 0
    %622 = vmatpush1.bf16.msra.mxu0 0
    %623 = vmatprep.subr.bf16.mxu0 0
    %624 = vmatpush1.bf16.msra.mxu0 0
    %625 = vmatprep.subr.bf16.mxu0 0
    %626 = vmatpush1.bf16.msra.mxu0 0
    %627 = vmatprep.subr.bf16.mxu0 0
    %628 = vmatpush1.bf16.msra.mxu0 0
    %629 = vmatprep.subr.bf16.mxu0 0
    %630 = vmatpush1.bf16.msra.mxu0 0
    %631 = vmatprep.subr.bf16.mxu0 0
    %632 = vmatpush1.bf16.msra.mxu0 0
    %633 = vmatprep.subr.bf16.mxu0 0
    %634 = vmatpush1.bf16.msra.mxu0 0
    %635 = vmatprep.subr.bf16.mxu0 0
    %636 = vmatpush1.bf16.msra.mxu0 0
    %637 = vmatprep.subr.bf16.mxu0 0
    %638 = vmatpush1.bf16.msra.mxu0 0
    %639 = vmatprep.subr.bf16.mxu0 0
    %640 = vmatpush1.bf16.msra.mxu0 0
    %641 = vmatprep.subr.bf16.mxu0 0
    %642 = vmatpush1.bf16.msra.mxu0 0
    %643 = vmatprep.mubr.bf16.mxu0 0
    %644 = vmatmul.mubr.bf16.gmra.mrb[0].mxu0 %v588
    %v645 = vpop.f32.mrb[0].mxu0
    %v646 = vadd.f32 %v561, %v645
    %v647 = vpop.f32.mrb[0].mxu0
    %v648 = vpop.f32.mrb[0].mxu0
    %v649 = vadd.f32 %v561, %v648
    %v650 = vpop.f32.mrb[0].mxu0
    %651 = vmatprep.mubr.bf16.mxu0 0
    %652 = vmatmul.mubr.bf16.gmra.mrb[0].mxu0 %v591
    %v653 = vpop.f32.mrb[0].mxu0
    %v654 = vadd.f32 %v561, %v653
    %v655 = vpop.f32.mrb[0].mxu0
    %v656 = vpop.f32.mrb[0].mxu0
    %v657 = vadd.f32 %v561, %v656
    %v658 = vpop.f32.mrb[0].mxu0
    %659 = vmatprep.mubr.bf16.mxu0 0
    %660 = vmatmul.mubr.bf16.gmra.mrb[0].mxu0 %v594
    %v661 = vpop.f32.mrb[0].mxu0
    %v662 = vadd.f32 %v561, %v661
    %v663 = vpop.f32.mrb[0].mxu0
    %v664 = vpop.f32.mrb[0].mxu0
    %v665 = vadd.f32 %v561, %v664
    %v666 = vpop.f32.mrb[0].mxu0
    %667 = vmatprep.mubr.bf16.mxu0 0
    %668 = vmatmul.mubr.bf16.gmra.mrb[0].mxu0 %v597
    %v669 = vpop.f32.mrb[0].mxu0
    %v670 = vadd.f32 %v561, %v669
    %v671 = vpop.f32.mrb[0].mxu0
    %v672 = vpop.f32.mrb[0].mxu0
    %v673 = vadd.f32 %v561, %v672
    %v674 = vpop.f32.mrb[0].mxu0
    %675 = vmatprep.mubr.bf16.mxu0 0
    %676 = vmatmul.mubr.bf16.gmra.mrb[0].mxu0 %v600
    %v677 = vpop.f32.mrb[0].mxu0
    %v678 = vadd.f32 %v561, %v677
    %v679 = vpop.f32.mrb[0].mxu0
    %v680 = vpop.f32.mrb[0].mxu0
    %v681 = vadd.f32 %v561, %v680
    %v682 = vpop.f32.mrb[0].mxu0
    %683 = vmatprep.mubr.bf16.mxu0 0
    %684 = vmatmul.mubr.bf16.gmra.mrb[0].mxu0 %v603
    %v685 = vpop.f32.mrb[0].mxu0
    %v686 = vadd.f32 %v561, %v685
    %v687 = vpop.f32.mrb[0].mxu0
    %v688 = vpop.f32.mrb[0].mxu0
    %v689 = vadd.f32 %v561, %v688
    %v690 = vpop.f32.mrb[0].mxu0
    %691 = vmatprep.mubr.bf16.mxu0 0
    %692 = vmatmul.mubr.bf16.gmra.mrb[0].mxu0 %v606
    %v693 = vpop.f32.mrb[0].mxu0
    %v694 = vadd.f32 %v561, %v693
    %v695 = vpop.f32.mrb[0].mxu0
    %v696 = vpop.f32.mrb[0].mxu0
    %v697 = vadd.f32 %v561, %v696
    %v698 = vpop.f32.mrb[0].mxu0
    %699 = vmatprep.mubr.bf16.mxu0 0
    %700 = vmatmul.mubr.bf16.gmra.mrb[0].mxu0 %v609
    %v701 = vpop.f32.mrb[0].mxu0
    %v702 = vadd.f32 %v561, %v701
    %v703 = vpop.f32.mrb[0].mxu0
    %v704 = vpop.f32.mrb[0].mxu0
    %v705 = vadd.f32 %v561, %v704
    %v706 = vpop.f32.mrb[0].mxu0
    %707 = vdwg.mxu0
    %v708 = vmax.f32 %v646, 0.0
    %v709 = vmax.f32 %v649, 0.0
    %v710 = vmax.f32 %v654, 0.0
    %v711 = vmax.f32 %v657, 0.0
    %v712 = vmax.f32 %v662, 0.0
    %v713 = vmax.f32 %v665, 0.0
    %v714 = vmax.f32 %v670, 0.0
    %v715 = vmax.f32 %v673, 0.0
    %v716 = vmax.f32 %v678, 0.0
    %v717 = vmax.f32 %v681, 0.0
    %v718 = vmax.f32 %v686, 0.0
    %v719 = vmax.f32 %v689, 0.0
    %v720 = vmax.f32 %v694, 0.0
    %v721 = vmax.f32 %v697, 0.0
    %v722 = vmax.f32 %v702, 0.0
    %v723 = vmax.f32 %v705, 0.0
    %v724 = vpack.c.bf16 %v709, %v708
    %v725 = vpack.c.bf16 %v711, %v710
    %v726 = vpack.c.bf16 %v713, %v712
    %v727 = vpack.c.bf16 %v715, %v714
    %v728 = vpack.c.bf16 %v717, %v716
    %v729 = vpack.c.bf16 %v719, %v718
    %v730 = vpack.c.bf16 %v721, %v720
    %v731 = vpack.c.bf16 %v723, %v722
    %v732 = vld [vmem:[%s6] sm:$0xf]
    %v733 = vld [vmem:[%s6 + $0x4] sm:$0xf]
    %v734 = vld [vmem:[%s6 + $0x8] sm:$0xf]
    %v735 = vld [vmem:[%s6 + $0xc] sm:$0xf]
    %v736 = vld [vmem:[%s6 + $0x10] sm:$0xf]
    %v737 = vld [vmem:[%s6 + $0x14] sm:$0xf]
    %v738 = vld [vmem:[%s6 + $0x18] sm:$0xf]
    %v739 = vld [vmem:[%s6 + $0x1c] sm:$0xf]
    %v748 = vunpack.c.l.b16 %v732
    %v749 = vunpack.c.l.b16 %v733
    %v750 = vunpack.c.l.b16 %v734
    %v751 = vunpack.c.l.b16 %v735
    %v752 = vunpack.c.l.b16 %v736
    %v753 = vunpack.c.l.b16 %v737
    %v754 = vunpack.c.l.b16 %v738
    %v755 = vunpack.c.l.b16 %v739
    %v756 = vpack.c.b16 %v749, %v748
    %v757 = vpack.c.b16 %v751, %v750
    %v758 = vpack.c.b16 %v753, %v752
    %v759 = vpack.c.b16 %v755, %v754
    %v765 = vsel %vm137, %v724, 0
    %v768 = vsel %vm137, %v725, 0
    %v771 = vsel %vm137, %v726, 0
    %v774 = vsel %vm137, %v727, 0
    %v777 = vsel %vm137, %v728, 0
    %v780 = vsel %vm137, %v729, 0
    %v783 = vsel %vm137, %v730, 0
    %v786 = vsel %vm137, %v731, 0
    %788 = vmatprep.subr.bf16.mxu0 0
    %789 = vmatpush1.bf16.msra.mxu0 %v756
    %790 = vmatprep.subr.bf16.mxu0 0
    %791 = vmatpush1.bf16.msra.mxu0 %v757
    %792 = vmatprep.subr.bf16.mxu0 0
    %793 = vmatpush1.bf16.msra.mxu0 %v758
    %794 = vmatprep.subr.bf16.mxu0 0
    %795 = vmatpush1.bf16.msra.mxu0 %v759
    %796 = vmatprep.subr.bf16.mxu0 0
    %797 = vmatpush1.bf16.msra.mxu0 0
    %798 = vmatprep.subr.bf16.mxu0 0
    %799 = vmatpush1.bf16.msra.mxu0 0
    %800 = vmatprep.subr.bf16.mxu0 0
    %801 = vmatpush1.bf16.msra.mxu0 0
    %802 = vmatprep.subr.bf16.mxu0 0
    %803 = vmatpush1.bf16.msra.mxu0 0
    %804 = vmatprep.subr.bf16.mxu0 0
    %805 = vmatpush1.bf16.msra.mxu0 0
    %806 = vmatprep.subr.bf16.mxu0 0
    %807 = vmatpush1.bf16.msra.mxu0 0
    %808 = vmatprep.subr.bf16.mxu0 0
    %809 = vmatpush1.bf16.msra.mxu0 0
    %810 = vmatprep.subr.bf16.mxu0 0
    %811 = vmatpush1.bf16.msra.mxu0 0
    %812 = vmatprep.subr.bf16.mxu0 0
    %813 = vmatpush1.bf16.msra.mxu0 0
    %814 = vmatprep.subr.bf16.mxu0 0
    %815 = vmatpush1.bf16.msra.mxu0 0
    %816 = vmatprep.subr.bf16.mxu0 0
    %817 = vmatpush1.bf16.msra.mxu0 0
    %818 = vmatprep.subr.bf16.mxu0 0
    %819 = vmatpush1.bf16.msra.mxu0 0
    %820 = vmatprep.mubr.bf16.mxu0 0
    %821 = vmatmul.mubr.bf16.gmra.mrb[0].mxu0 %v765
    %v822 = vpop.f32.mrb[0].mxu0
    %v823 = vadd.f32 0.0, %v822
    %v824 = vpop.f32.mrb[0].mxu0
    %v825 = vpop.f32.mrb[0].mxu0
    %v826 = vadd.f32 0.0, %v825
    %v827 = vpop.f32.mrb[0].mxu0
    %828 = vmatprep.mubr.bf16.mxu0 0
    %829 = vmatmul.mubr.bf16.gmra.mrb[0].mxu0 %v768
    %v830 = vpop.f32.mrb[0].mxu0
    %v831 = vadd.f32 0.0, %v830
    %v832 = vpop.f32.mrb[0].mxu0
    %v833 = vpop.f32.mrb[0].mxu0
    %v834 = vadd.f32 0.0, %v833
    %v835 = vpop.f32.mrb[0].mxu0
    %836 = vmatprep.mubr.bf16.mxu0 0
    %837 = vmatmul.mubr.bf16.gmra.mrb[0].mxu0 %v771
    %v838 = vpop.f32.mrb[0].mxu0
    %v839 = vadd.f32 0.0, %v838
    %v840 = vpop.f32.mrb[0].mxu0
    %v841 = vpop.f32.mrb[0].mxu0
    %v842 = vadd.f32 0.0, %v841
    %v843 = vpop.f32.mrb[0].mxu0
    %844 = vmatprep.mubr.bf16.mxu0 0
    %845 = vmatmul.mubr.bf16.gmra.mrb[0].mxu0 %v774
    %v846 = vpop.f32.mrb[0].mxu0
    %v847 = vadd.f32 0.0, %v846
    %v848 = vpop.f32.mrb[0].mxu0
    %v849 = vpop.f32.mrb[0].mxu0
    %v850 = vadd.f32 0.0, %v849
    %v851 = vpop.f32.mrb[0].mxu0
    %852 = vmatprep.mubr.bf16.mxu0 0
    %853 = vmatmul.mubr.bf16.gmra.mrb[0].mxu0 %v777
    %v854 = vpop.f32.mrb[0].mxu0
    %v855 = vadd.f32 0.0, %v854
    %v856 = vpop.f32.mrb[0].mxu0
    %v857 = vpop.f32.mrb[0].mxu0
    %v858 = vadd.f32 0.0, %v857
    %v859 = vpop.f32.mrb[0].mxu0
    %860 = vmatprep.mubr.bf16.mxu0 0
    %861 = vmatmul.mubr.bf16.gmra.mrb[0].mxu0 %v780
    %v862 = vpop.f32.mrb[0].mxu0
    %v863 = vadd.f32 0.0, %v862
    %v864 = vpop.f32.mrb[0].mxu0
    %v865 = vpop.f32.mrb[0].mxu0
    %v866 = vadd.f32 0.0, %v865
    %v867 = vpop.f32.mrb[0].mxu0
    %868 = vmatprep.mubr.bf16.mxu0 0
    %869 = vmatmul.mubr.bf16.gmra.mrb[0].mxu0 %v783
    %v870 = vpop.f32.mrb[0].mxu0
    %v871 = vadd.f32 0.0, %v870
    %v872 = vpop.f32.mrb[0].mxu0
    %v873 = vpop.f32.mrb[0].mxu0
    %v874 = vadd.f32 0.0, %v873
    %v875 = vpop.f32.mrb[0].mxu0
    %876 = vmatprep.mubr.bf16.mxu0 0
    %877 = vmatmul.mubr.bf16.gmra.mrb[0].mxu0 %v786
    %v878 = vpop.f32.mrb[0].mxu0
    %v879 = vadd.f32 0.0, %v878
    %v880 = vpop.f32.mrb[0].mxu0
    %v881 = vpop.f32.mrb[0].mxu0
    %v882 = vadd.f32 0.0, %v881
    %v883 = vpop.f32.mrb[0].mxu0
    %884 = vdwg.mxu0
    %v885 = vlaneseq
    %v886 = vshrl.u32 %v885, 7
    %v887 = vadd.s32 %v886, 8
    %v888 = vadd.s32 %v886, 16
    %v889 = vadd.s32 %v886, 24
    %v890 = vadd.s32 %v886, 32
    %v891 = vadd.s32 %v886, 40
    %v892 = vadd.s32 %v886, 48
    %v893 = vadd.s32 %v886, 56
    %v894 = vadd.s32 %v886, 64
    %v895 = vadd.s32 %v886, 72
    %v896 = vadd.s32 %v886, 80
    %v897 = vadd.s32 %v886, 88
    %v898 = vadd.s32 %v886, 96
    %v899 = vadd.s32 %v886, 104
    %v900 = vadd.s32 %v886, 112
    %v901 = vadd.s32 %v886, 120
    %v902 = vlaneseq
    %v903 = vand.u32 %v902, 127
    %v904 = vand.u32 %v886, 127
    %v905 = vand.u32 %v887, 127
    %v906 = vand.u32 %v888, 127
    %v907 = vand.u32 %v889, 127
    %v908 = vand.u32 %v890, 127
    %v909 = vand.u32 %v891, 127
    %v910 = vand.u32 %v892, 127
    %v911 = vand.u32 %v893, 127
    %v912 = vand.u32 %v894, 127
    %v913 = vand.u32 %v895, 127
    %v914 = vand.u32 %v896, 127
    %v915 = vand.u32 %v897, 127
    %v916 = vand.u32 %v898, 127
    %v917 = vand.u32 %v899, 127
    %v918 = vand.u32 %v900, 127
    %v919 = vand.u32 %v901, 127
    %vm920 = vcmp.eq.s32.totalorder %v904, %v903
    %vm921 = vcmp.eq.s32.totalorder %v905, %v903
    %vm922 = vcmp.eq.s32.totalorder %v906, %v903
    %vm923 = vcmp.eq.s32.totalorder %v907, %v903
    %vm924 = vcmp.eq.s32.totalorder %v908, %v903
    %vm925 = vcmp.eq.s32.totalorder %v909, %v903
    %vm926 = vcmp.eq.s32.totalorder %v910, %v903
    %vm927 = vcmp.eq.s32.totalorder %v911, %v903
    %vm928 = vcmp.eq.s32.totalorder %v912, %v903
    %vm929 = vcmp.eq.s32.totalorder %v913, %v903
    %vm930 = vcmp.eq.s32.totalorder %v914, %v903
    %vm931 = vcmp.eq.s32.totalorder %v915, %v903
    %vm932 = vcmp.eq.s32.totalorder %v916, %v903
    %vm933 = vcmp.eq.s32.totalorder %v917, %v903
    %vm934 = vcmp.eq.s32.totalorder %v918, %v903
    %vm935 = vcmp.eq.s32.totalorder %v919, %v903
    %v936 = vsel %vm920, %v823, 0.0
    %v937 = vsel %vm921, %v826, 0.0
    %v938 = vsel %vm922, %v831, 0.0
    %v939 = vsel %vm923, %v834, 0.0
    %v940 = vsel %vm924, %v839, 0.0
    %v941 = vsel %vm925, %v842, 0.0
    %v942 = vsel %vm926, %v847, 0.0
    %v943 = vsel %vm927, %v850, 0.0
    %v944 = vsel %vm928, %v855, 0.0
    %v945 = vsel %vm929, %v858, 0.0
    %v946 = vsel %vm930, %v863, 0.0
    %v947 = vsel %vm931, %v866, 0.0
    %v948 = vsel %vm932, %v871, 0.0
    %v949 = vsel %vm933, %v874, 0.0
    %v950 = vsel %vm934, %v879, 0.0
    %v951 = vsel %vm935, %v882, 0.0
    %v952 = vpack.c.bf16 %v937, %v936
    %v953 = vpack.c.bf16 %v939, %v938
    %v954 = vpack.c.bf16 %v941, %v940
    %v955 = vpack.c.bf16 %v943, %v942
    %v956 = vpack.c.bf16 %v945, %v944
    %v957 = vpack.c.bf16 %v947, %v946
    %v958 = vpack.c.bf16 %v949, %v948
    %v959 = vpack.c.bf16 %v951, %v950
    %v960 = vmul.u32 %v886, 128
    %vm961 = vcmp.ge.s32.totalorder %v903, %v960
    %v962 = vadd.s32 %v960, 128
    %vm963 = vcmp.lt.s32.totalorder %v903, %v962
    %vm964 = vmand %vm961, %vm963
    %v965 = vsel %vm964, 1.0, 0.0
    %v966 = vpack.c.bf16 %v965, %v965
    %v967 = vld [vmem:[#allocation2] sm:$0x1]
    %969 = vset.pattern.permute.xlu0 0
    %970 = vperm.xlu0 %969, %v967
    %v971 = vpop.permute.xlu0 %970
    %v973 = vlaneseq
    %v974 = vshrl.u32 %v973, 7
    %v975 = vsub.s32 0, %v974
    %v976 = vrot.slane %v971, %v975
    %977 = vmatprep.subr.bf16.mxu0 0
    %978 = vmatpush1.bf16.msra.mxu0 %v952
    %979 = vmatprep.subr.bf16.mxu0 0
    %980 = vmatpush1.bf16.msra.mxu0 %v953
    %981 = vmatprep.subr.bf16.mxu0 0
    %982 = vmatpush1.bf16.msra.mxu0 %v954
    %983 = vmatprep.subr.bf16.mxu0 0
    %984 = vmatpush1.bf16.msra.mxu0 %v955
    %985 = vmatprep.subr.bf16.mxu0 0
    %986 = vmatpush1.bf16.msra.mxu0 %v956
    %987 = vmatprep.subr.bf16.mxu0 0
    %988 = vmatpush1.bf16.msra.mxu0 %v957
    %989 = vmatprep.subr.bf16.mxu0 0
    %990 = vmatpush1.bf16.msra.mxu0 %v958
    %991 = vmatprep.subr.bf16.mxu0 0
    %992 = vmatpush1.bf16.msra.mxu0 %v959
    %993 = vmatprep.subr.bf16.mxu0 0
    %994 = vmatpush1.bf16.msra.mxu0 0
    %995 = vmatprep.subr.bf16.mxu0 0
    %996 = vmatpush1.bf16.msra.mxu0 0
    %997 = vmatprep.subr.bf16.mxu0 0
    %998 = vmatpush1.bf16.msra.mxu0 0
    %999 = vmatprep.subr.bf16.mxu0 0
    %1000 = vmatpush1.bf16.msra.mxu0 0
    %1001 = vmatprep.subr.bf16.mxu0 0
    %1002 = vmatpush1.bf16.msra.mxu0 0
    %1003 = vmatprep.subr.bf16.mxu0 0
    %1004 = vmatpush1.bf16.msra.mxu0 0
    %1005 = vmatprep.subr.bf16.mxu0 0
    %1006 = vmatpush1.bf16.msra.mxu0 0
    %1007 = vmatprep.subr.bf16.mxu0 0
    %1008 = vmatpush1.bf16.msra.mxu0 0
    %1009 = vmatprep.mubr.bf16.mxu0 0
    %1010 = vmatmul.mubr.bf16.gmra.mrb[0].mxu0 %v966
    %v1011 = vpop.f32.mrb[0].mxu0
    %v1012 = vadd.f32 %v976, %v1011
    %v1013 = vpop.f32.mrb[0].mxu0
    %v1014 = vpop.f32.mrb[0].mxu0
    %v1015 = vpop.f32.mrb[0].mxu0
    %1016 = vdwg.mxu0
    %1017 = vst [vmem:[#allocation3] sm:$0x1] %v1012
    // Predicated region
    $region34: #{tpu_custom_call.1} parent=1 // pred_check
      _
    $region35: #{tpu_custom_call.1} parent=1 // pred_check_branch
      %1019 = sbr.rel (0) target = $region37
    $region36: #{tpu_custom_call.1} parent=1 // pred_region
      %s1021 = ssub.s32 16, 16
      %1022 = vsyncadd [#allocation4], %s1021
      %s1024 = sshll.u32 [#allocation3], 4
      %s1025 = int_to_ptr.vmem [resolvable:$true] %s1024
      %1027 = dma.vmem_to_hbm [thread:$0]  %s1025, 16, %s8, [#allocation4]
    $region37: #{tpu_custom_call.1} parent=1 // pred_fallthru
      _
    // Predicated region
    $region38: #{tpu_custom_call.1} parent=1 // pred_check
      _
    $region39: #{tpu_custom_call.1} parent=1 // pred_check_branch
      %1029 = sbr.rel (0) target = $region41
    $region40: #{tpu_custom_call.1} parent=1 // pred_region
      %1030 = dma.done [#allocation4], 16
    $region41: #{tpu_custom_call.1} parent=1 // pred_fallthru
      _
    %1031 = vsyncpa [#allocation4], 1

</llo_original>
